<compile_context>
chip_gen: v5e
topology: v5e:2x2
jax: 0.10.0
libtpu: 0.0.40
codegen_flags: <defaults>
</compile_context>

<pallas_src>
import functools

import jax
import jax.numpy as jnp
from jax.experimental import pallas as pl
from jax.experimental.pallas import tpu as pltpu


def embed_kernel(x_ref, w_ref, b_ref, o_ref):
    # x_ref: (TM, D_in) f32, w_ref: (D_in, D_out) bf16, b_ref: (1, D_out) f32
    x_bf = x_ref[...].astype(jnp.bfloat16)          # VPU cast, hidden under MXU
    y = jnp.dot(x_bf, w_ref[...],                    # plain (m,k)x(k,n) MXU matmul
                preferred_element_type=jnp.float32)  # (TM, D_out) f32
    y = y + b_ref[...]                               # broadcast (1, D_out)

    # Row-wise L2 normalization, all in f32.  rsqrt -> EUP slot (free-ish).
    sq_sum = jnp.sum(y * y, axis=-1, keepdims=True)
    inv_norm = jax.lax.rsqrt(jnp.maximum(sq_sum, 1e-12))   # eps-guarded
    o_ref[...] = (y * inv_norm).astype(o_ref.dtype)


def _vmem_bytes(tm, d_in, d_out, out_itemsize):
    """Rough VMEM working-set estimate for one TensorCore."""
    x_bufs = 2 * tm * d_in * 4           # f32 x tile, double-buffered
    x_cast = tm * d_in * 2               # in-kernel bf16 copy of the x tile
    w_buf = d_in * d_out * 2             # bf16 weight, single-buffered
    b_buf = d_out * 4                    # bias
    out_bufs = 2 * tm * d_out * out_itemsize
    y_tmps = 3 * tm * d_out * 4          # f32 y + epilogue temporaries
    return x_bufs + x_cast + w_buf + b_buf + out_bufs + y_tmps


def _choose_tm(batch, tm_req, d_in, d_out, out_itemsize):
    """Pick a batch tile: multiple of 16, >=2 grid steps if possible, VMEM-safe."""
    if batch <= 16:
        return batch                      # full-batch block is always legal
    tm = min(tm_req, batch)
    tm = max(16, (tm // 16) * 16)         # bf16 packs 16 sublanes / vreg
    if batch >= 32:
        # Keep at least 2 grid steps so the "parallel" axis can shard across
        # v7x's two TensorCores.
        half = ((pl.cdiv(batch, 2) + 15) // 16) * 16
        tm = min(tm, half)
    # Shrink until the working set fits a v7x-conservative VMEM budget.
    budget = 56 << 20
    while tm > 16 and _vmem_bytes(tm, d_in, d_out, out_itemsize) > budget:
        tm = max(16, ((tm // 2) // 16) * 16)
    return tm


@functools.partial(jax.jit, static_argnames=("tm", "out_dtype"))
def embed(x, weight, bias, *, tm=256, out_dtype=None):
    """x: (B, ...) f32, weight: (D_out, D_in) f32 (PyTorch layout), bias: (D_out,)."""
    batch = x.shape[0]
    x2 = x.reshape(batch, -1)                 # x.view(B, -1) — flatten glue
    d_in = x2.shape[1]
    d_out = weight.shape[0]

    out_dtype = x.dtype if out_dtype is None else out_dtype
    out_itemsize = jnp.dtype(out_dtype).itemsize

    # Weight transpose fused into the f32->bf16 cast: one XLA copy, (d_in, d_out).
    w_t = weight.T.astype(jnp.bfloat16)
    b2 = bias.reshape(1, d_out).astype(jnp.float32)

    tm = _choose_tm(batch, tm, d_in, d_out, out_itemsize)
    grid = (pl.cdiv(batch, tm),)              # ragged edge handled by Pallas

    vmem_limit = min(64 << 20,
                     max(32 << 20, _vmem_bytes(tm, d_in, d_out, out_itemsize) + (8 << 20)))

    cost = pl.CostEstimate(
        flops=2 * batch * d_in * d_out,
        transcendentals=batch,                # one rsqrt per row
        bytes_accessed=(batch * d_in * 4 + d_in * d_out * 2 + d_out * 4
                        + batch * d_out * out_itemsize),
    )

    return pl.pallas_call(
        embed_kernel,
        out_shape=jax.ShapeDtypeStruct((batch, d_out), out_dtype),
        grid_spec=pltpu.PrefetchScalarGridSpec(
            num_scalar_prefetch=0,
            grid=grid,
            in_specs=[
                pl.BlockSpec((tm, d_in), lambda i: (i, 0)),          # x tile (f32)
                pl.BlockSpec((d_in, d_out), lambda i: (0, 0),
                             pipeline_mode=pl.Buffered(1)),          # weight (bf16, resident)
                pl.BlockSpec((1, d_out), lambda i: (0, 0),
                             pipeline_mode=pl.Buffered(1)),          # bias (f32, resident)
            ],
            out_specs=pl.BlockSpec((tm, d_out), lambda i: (i, 0)),
        ),
        compiler_params=pltpu.CompilerParams(
            dimension_semantics=("parallel",),
            vmem_limit_bytes=vmem_limit,
        ),
        cost_estimate=cost,
    )(x2, w_t, b2)


if __name__ == "__main__":
    # Embed(dim_in=256, dim_out=128) on x of shape (48, 4, 8, 8): the wrapper
    # flattens trailing dims exactly like x.view(B, -1).  B=48 exercises the
    # ragged-boundary path (tm=32 -> 2 grid steps, last block half-valid).
    B, C, H, W = 48, 4, 8, 8
    D_IN, D_OUT = C * H * W, 128

    key = jax.random.PRNGKey(0)
    kx, kw, kb = jax.random.split(key, 3)
    x = jax.random.normal(kx, (B, C, H, W), dtype=jnp.float32)
    # Deterministic parameter init (PyTorch nn.Linear-like uniform bound).
    bound = 1.0 / (D_IN ** 0.5)
    weight = jax.random.uniform(kw, (D_OUT, D_IN), jnp.float32, -bound, bound)
    bias = jax.random.uniform(kb, (D_OUT,), jnp.float32, -bound, bound)

    out = jax.block_until_ready(embed(x, weight, bias))
    assert out.shape == (B, D_OUT)
    assert not bool(jnp.any(jnp.isnan(out)))

    # Reference with the kernel's precision contract (bf16 matmul inputs,
    # f32 accumulate / epilogue).
    x2 = x.reshape(B, -1)
    xb = x2.astype(jnp.bfloat16).astype(jnp.float32)
    wb = weight.astype(jnp.bfloat16).astype(jnp.float32)
    y_ref = xb @ wb.T + bias
    ref = y_ref / jnp.sqrt(jnp.sum(y_ref * y_ref, axis=1, keepdims=True))
    assert jnp.allclose(out, ref, atol=2e-4, rtol=2e-4)

    # Loose check against the full-f32 PyTorch-equivalent math.
    y32 = x2 @ weight.T + bias
    ref32 = y32 / jnp.sqrt(jnp.sum(y32 * y32, axis=1, keepdims=True))
    assert jnp.allclose(out, ref32, atol=2e-2, rtol=2e-2)

    # Rows must be unit-norm.
    assert jnp.allclose(jnp.linalg.norm(out, axis=1), 1.0, atol=1e-4)

    print("KERNEL_OK")
</pallas_src>

<mosaic_0001>
module attributes {stable_mosaic.version = 11 : i64} {
  func.func @embed_kernel(%arg0: i32, %arg1: memref<32x256xf32, #tpu.memory_space<vmem>>, %arg2: memref<256x128xbf16, #tpu.memory_space<vmem>>, %arg3: memref<1x128xf32, #tpu.memory_space<vmem>>, %arg4: memref<32x128xf32, #tpu.memory_space<vmem>>) attributes {dimension_semantics = [#tpu.dimension_semantics<parallel>], iteration_bounds = array<i64: 2>, scalar_prefetch = 0 : i64, scratch_operands = 0 : i64, tpu.core_type = #tpu.core_type<tc>, window_params = [{transform_indices = @transform_0, window_bounds = array<i64: 32, 256>}, {pipeline_mode = #tpu.pipeline_mode<synchronous>, transform_indices = @transform_1, window_bounds = array<i64: 256, 128>}, {pipeline_mode = #tpu.pipeline_mode<synchronous>, transform_indices = @transform_2, window_bounds = array<i64: 1, 128>}, {transform_indices = @transform_3, window_bounds = array<i64: 32, 128>}]} {
    %c0 = arith.constant 0 : index
    %c0_0 = arith.constant 0 : index
    %0 = vector.load %arg1[%c0, %c0_0] : memref<32x256xf32, #tpu.memory_space<vmem>>, vector<32x256xf32>
    %1 = arith.truncf %0 : vector<32x256xf32> to vector<32x256xbf16>
    %c0_1 = arith.constant 0 : index
    %c0_2 = arith.constant 0 : index
    %2 = vector.load %arg2[%c0_1, %c0_2] : memref<256x128xbf16, #tpu.memory_space<vmem>>, vector<256x128xbf16>
    %cst = arith.constant dense<0.000000e+00> : vector<32x128xf32>
    %3 = tpu.matmul %1, %2, %cst {dimension_numbers = #tpu.dot_dimension_numbers<[1], [0], [0], [1], [0, 0, 1, 1], [], []>} : vector<32x256xbf16>, vector<256x128xbf16>, vector<32x128xf32> -> vector<32x128xf32>
    %c0_3 = arith.constant 0 : index
    %c0_4 = arith.constant 0 : index
    %4 = vector.load %arg3[%c0_3, %c0_4] : memref<1x128xf32, #tpu.memory_space<vmem>>, vector<1x128xf32>
    %5 = vector.broadcast %4 : vector<1x128xf32> to vector<32x128xf32>
    %6 = arith.addf %3, %5 : vector<32x128xf32>
    %7 = arith.mulf %6, %6 : vector<32x128xf32>
    %cst_5 = arith.constant dense<0.000000e+00> : vector<32xf32>
    %8 = vector.multi_reduction <add>, %7, %cst_5 [1] : vector<32x128xf32> to vector<32xf32>
    %9 = vector.shape_cast %8 : vector<32xf32> to vector<32x1xf32>
    %cst_6 = arith.constant 9.99999996E-13 : f32
    %10 = vector.broadcast %cst_6 : f32 to vector<32x1xf32>
    %11 = arith.maximumf %9, %10 : vector<32x1xf32>
    %12 = math.rsqrt %11 : vector<32x1xf32>
    %13 = vector.broadcast %12 : vector<32x1xf32> to vector<32x128xf32>
    %14 = arith.mulf %6, %13 : vector<32x128xf32>
    %c0_7 = arith.constant 0 : index
    %c0_8 = arith.constant 0 : index
    %15 = vector.load %arg4[%c0_7, %c0_8] : memref<32x128xf32, #tpu.memory_space<vmem>>, vector<32x128xf32>
    tpu.vector_store %arg4[%c0_7, %c0_8], %14 {strides = array<i32>} : memref<32x128xf32, #tpu.memory_space<vmem>>, vector<32x128xf32>,
    return
  }
  func.func @transform_0(%arg0: i32) -> (i32, i32) {
    %c0_i32 = arith.constant 0 : i32
    %c0_i32_0 = arith.constant 0 : i32
    return %arg0, %c0_i32 : i32, i32
  }
  func.func @transform_1(%arg0: i32) -> (i32, i32) {
    %c0_i32 = arith.constant 0 : i32
    %c0_i32_0 = arith.constant 0 : i32
    %c0_i32_1 = arith.constant 0 : i32
    return %c0_i32, %c0_i32_0 : i32, i32
  }
  func.func @transform_2(%arg0: i32) -> (i32, i32) {
    %c0_i32 = arith.constant 0 : i32
    %c0_i32_0 = arith.constant 0 : i32
    %c0_i32_1 = arith.constant 0 : i32
    return %c0_i32, %c0_i32_0 : i32, i32
  }
  func.func @transform_3(%arg0: i32) -> (i32, i32) {
    %c0_i32 = arith.constant 0 : i32
    %c0_i32_0 = arith.constant 0 : i32
    return %arg0, %c0_i32 : i32, i32
  }
}

</mosaic_0001>

<llo_original>
// kernel: embed.1
$region0: #{embed.1}
  #allocation0 [shape = 'u32[]', space=smem, size = 0x4, offset = 0x4, fixed_abs, tag = 'smem constant byte address 0x4 - core index']
  #allocation1 [shape = 'u32[72,128]{1,0:T(1,128)}', space=vmem, size = 0x9000, scoped, tag = 'internal scratch']
  %s0 = inlined_call_operand.vmem [shape: f32[48,256], index: 0, kind: input, shape index: {}]
  %s1 = inlined_call_operand.vmem [shape: bf16[256,128], index: 1, kind: input, shape index: {}]
  %s2 = inlined_call_operand.vmem [shape: f32[1,128], index: 2, kind: input, shape index: {}]
  %s3 = inlined_call_operand.hbm [shape: f32[48,128], index: 3, kind: output, shape index: {}]
  %s4 = sld [smem:[#allocation0]]
  $region45: #{embed.1} parent=0
    _
  %s6 = ssub.s32 1, %s4
  %s7 = scalar_select 0, %s6, %s4
  $region1: #{embed.1} parent=0
    #allocation2 [shape = 'u8[32768]{0}', space=vmem, size = 0x8000, scoped, tag = 'output window, operand 0']
    #allocation3 [shape = 's32[2]{0}', space=sflag, size = 0x8, scoped, tag = 'scoped memory for embed.1']
    %8 = vsyncpa [#allocation3], 0
    %s9 = scalar_lea.sflag [#allocation3], 1
    %10 = vsyncpa %s9, 0
    loop: start=0, step=1, limit=4
    $region2: #{embed.1} parent=1 // loop_pre_header
      _
    $region3: #{embed.1} parent=1 // loop_header
      %s12 = sphi 0, %s16
      %p13 = scmp.ge.s32.totalorder %s12, 4
      %s22 = sphi 0, %s24
      %s25 = sphi 0, %s22
      %s26 = sphi 0, %s25
      %s42 = sphi 0, %s26
      %s46 = sphi 0, %s46
      %s48 = sphi 0, %s46
      %s49 = sphi 0, %s48
      %s63 = sphi 0, %s49
      %s67 = sphi 0, %s67
      %s69 = sphi 0, %s67
      %s70 = sphi 0, %s69
      %s84 = sphi 0, %s70
      %s90 = sphi 0, %s92
      %s93 = sphi 0, %s90
      %s94 = sphi 0, %s93
      %s110 = sphi 0, %s94
    $region4: #{embed.1} parent=1 // loop_header_branch
      %15 = sbr.rel (%p13) target = $region8
    $region5: #{embed.1} parent=1 // loop_body
      %s17 = ssub.s32 %s12, 1
      %s18 = ssub.s32 %s12, 2
      %s19 = sadd.s32 %s12, 1
      %s20 = ssub.s32 %s12, %s19
      %p21 = scmp.eq.s32.totalorder %s20, 0
      %s23 = sadd.s32 %s22, 1
      %s24 = scalar_select %p21, %s22, %s23
      %p27 = pneg %p21
      %p28 = scmp.eq.s32.totalorder %s12, 1
      %p29 = por %p27, %p28
      %p30 = scmp.ne.s32.totalorder %s22, %s25
      %p31 = scmp.eq.s32.totalorder %s12, 0
      %p32 = por %p30, %p31
      %p33 = scmp.ne.s32.totalorder %s22, %s25
      %p34 = scmp.eq.s32.totalorder %s17, 1
      %p35 = por %p33, %p34
      %p36 = scmp.ne.s32.totalorder %s25, %s26
      %p37 = scmp.eq.s32.totalorder %s17, 0
      %p38 = por %p36, %p37
      %p39 = scmp.ne.s32.totalorder %s25, %s26
      %p40 = scmp.eq.s32.totalorder %s18, 1
      %p41 = por %p39, %p40
      %p43 = scmp.ne.s32.totalorder %s26, %s42
      %p44 = scmp.eq.s32.totalorder %s18, 0
      %p45 = por %p43, %p44
      %s47 = sadd.s32 %s46, 1
      %p50 = scmp.eq.s32.totalorder %s12, 1
      %p51 = scmp.ne.s32.totalorder %s46, %s48
      %p52 = scmp.eq.s32.totalorder %s12, 0
      %p53 = por %p51, %p52
      %p54 = scmp.ne.s32.totalorder %s46, %s48
      %p55 = scmp.eq.s32.totalorder %s17, 1
      %p56 = por %p54, %p55
      %p57 = scmp.ne.s32.totalorder %s48, %s49
      %p58 = scmp.eq.s32.totalorder %s17, 0
      %p59 = por %p57, %p58
      %p60 = scmp.ne.s32.totalorder %s48, %s49
      %p61 = scmp.eq.s32.totalorder %s18, 1
      %p62 = por %p60, %p61
      %p64 = scmp.ne.s32.totalorder %s49, %s63
      %p65 = scmp.eq.s32.totalorder %s18, 0
      %p66 = por %p64, %p65
      %s68 = sadd.s32 %s67, 1
      %p71 = scmp.eq.s32.totalorder %s12, 1
      %p72 = scmp.ne.s32.totalorder %s67, %s69
      %p73 = scmp.eq.s32.totalorder %s12, 0
      %p74 = por %p72, %p73
      %p75 = scmp.ne.s32.totalorder %s67, %s69
      %p76 = scmp.eq.s32.totalorder %s17, 1
      %p77 = por %p75, %p76
      %p78 = scmp.ne.s32.totalorder %s69, %s70
      %p79 = scmp.eq.s32.totalorder %s17, 0
      %p80 = por %p78, %p79
      %p81 = scmp.ne.s32.totalorder %s69, %s70
      %p82 = scmp.eq.s32.totalorder %s18, 1
      %p83 = por %p81, %p82
      %p85 = scmp.ne.s32.totalorder %s70, %s84
      %p86 = scmp.eq.s32.totalorder %s18, 0
      %p87 = por %p85, %p86
      %s88 = ssub.s32 %s12, %s19
      %p89 = scmp.eq.s32.totalorder %s88, 0
      %s91 = sadd.s32 %s90, 1
      %s92 = scalar_select %p89, %s90, %s91
      %p95 = pneg %p89
      %p96 = scmp.eq.s32.totalorder %s12, 1
      %p97 = por %p95, %p96
      %p98 = scmp.ne.s32.totalorder %s90, %s93
      %p99 = scmp.eq.s32.totalorder %s12, 0
      %p100 = por %p98, %p99
      %p101 = scmp.ne.s32.totalorder %s90, %s93
      %p102 = scmp.eq.s32.totalorder %s17, 1
      %p103 = por %p101, %p102
      %p104 = scmp.ne.s32.totalorder %s93, %s94
      %p105 = scmp.eq.s32.totalorder %s17, 0
      %p106 = por %p104, %p105
      %p107 = scmp.ne.s32.totalorder %s93, %s94
      %p108 = scmp.eq.s32.totalorder %s18, 1
      %p109 = por %p107, %p108
      %p111 = scmp.ne.s32.totalorder %s94, %s110
      %p112 = scmp.eq.s32.totalorder %s18, 0
      %p113 = por %p111, %p112
      %p114 = scmp.le.s32.totalorder 1, %s12
      %p115 = scmp.lt.s32.totalorder %s12, 3
      %p116 = pnand %p114, %p115
      %p117 = pneg %p116
      // Predicated region
      $region9: #{embed.1} parent=5 // pred_check
        _
      $region10: #{embed.1} parent=5 // pred_check_branch
        %119 = sbr.rel (%p116) target = $region12
      $region11: #{embed.1} parent=5 // pred_region
        %s120 = ssub.s32 %s12, 1
        // Predicated region
        $region13: #{embed.1} parent=11 // pred_check
          %p121 = pneg %p59
        $region14: #{embed.1} parent=11 // pred_check_branch
          %123 = sbr.rel (%p121) target = $region16
        $region15: #{embed.1} parent=11 // pred_region
          _
        $region16: #{embed.1} parent=11 // pred_fallthru
          _
        // Predicated region
        $region17: #{embed.1} parent=11 // pred_check
          %p124 = pneg %p80
        $region18: #{embed.1} parent=11 // pred_check_branch
          %126 = sbr.rel (%p124) target = $region20
        $region19: #{embed.1} parent=11 // pred_region
          _
        $region20: #{embed.1} parent=11 // pred_fallthru
          _
      $region12: #{embed.1} parent=5 // pred_fallthru
        _
      %p127 = scmp.lt.s32.totalorder %s12, 2
      // Predicated region
      $region21: #{embed.1} parent=5 // pred_check
        %p128 = pneg %p127
      $region22: #{embed.1} parent=5 // pred_check_branch
        %130 = sbr.rel (%p128) target = $region24
      $region23: #{embed.1} parent=5 // pred_region
        // Predicated region
        $region25: #{embed.1} parent=23 // pred_check
          %p131 = pneg %p32
        $region26: #{embed.1} parent=23 // pred_check_branch
          %133 = sbr.rel (%p131) target = $region28
        $region27: #{embed.1} parent=23 // pred_region
          %s134 = smul.u32 4, %s12
          %s135 = ssub.s32 6, %s134
          %p136 = scmp.lt.s32.totalorder %s135, 4
          %s137 = scalar_select %p136, %s135, 4
          %s138 = smul.u32 8, %s137
          %s139 = smul.u32 %s138, 2
          %p140 = scmp.lt.s32.totalorder %s134, 5
          %s141 = scalar_select %p140, %s134, 5
          %s142 = smul.addr %s141, 2
          %s143 = smul.addr %s142, 8
          %s144 = scalar_lea.vmem %s0, %s143
          %s145 = smul.u32 4, %s12
          %s146 = ssub.s32 6, %s145
          %p147 = scmp.lt.s32.totalorder %s146, 4
          %s148 = scalar_select %p147, %s146, 4
          %s149 = smul.u32 8, %s148
          %s150 = smul.u32 %s149, 2
        $region28: #{embed.1} parent=23 // pred_fallthru
          _
      $region24: #{embed.1} parent=5 // pred_fallthru
        _
      %p151 = scmp.le.s32.totalorder 1, %s12
      %p152 = scmp.lt.s32.totalorder %s12, 3
      %p153 = pnand %p151, %p152
      %p154 = pneg %p153
      // Predicated region
      $region29: #{embed.1} parent=5 // pred_check
        _
      $region30: #{embed.1} parent=5 // pred_check_branch
        %156 = sbr.rel (%p153) target = $region32
      $region31: #{embed.1} parent=5 // pred_region
        %s157 = ssub.s32 %s12, 1
        %s158 = smul.u32 4, %s17
        %s159 = ssub.s32 6, %s158
        %p160 = scmp.lt.s32.totalorder %s159, 4
        %s161 = scalar_select %p160, %s159, 4
        %s162 = smul.u32 8, %s161
        %s163 = smul.u32 %s162, 2
        %p164 = scmp.lt.s32.totalorder %s158, 5
        %s165 = scalar_select %p164, %s158, 5
        %s166 = smul.addr %s165, 2
        %s167 = smul.addr %s166, 8
        %s168 = scalar_lea.vmem %s0, %s167
        %p169 = pneg %p38
        %p170 = pneg %p35
        %p171 = pneg %p59
        %p172 = pneg %p56
        %p173 = pneg %p80
        %p174 = pneg %p77
        %p175 = pneg %p106
        %p176 = pneg %p103
        %s177 = sand.u32 %s93, 1
        %s178 = scalar_lea.sflag [#allocation3], %s177
        %s179 = sand.u32 %s93, 1
        %s180 = smul.addr %s179, 32
        %s181 = scalar_lea.vmem [#allocation2], %s180
        %s182 = smul.u32 4, %s17
        %s183 = ssub.s32 6, %s182
        %p184 = scmp.lt.s32.totalorder %s183, 4
        %s185 = scalar_select %p184, %s183, 4
        %s186 = smul.u32 8, %s185
        %s187 = smul.u32 %s186, 2
        %p188 = scmp.lt.s32.totalorder %s182, 5
        %s189 = scalar_select %p188, %s182, 5
        %s190 = smul.addr %s189, 2
        %s191 = smul.addr %s190, 8
        %s192 = scalar_lea.vmem %s0, %s191
        %s193 = smul.u32 4, %s17
        %s194 = ssub.s32 6, %s193
        %p195 = scmp.lt.s32.totalorder %s194, 4
        %s196 = scalar_select %p195, %s194, 4
        %s197 = smul.u32 8, %s196
        %s198 = smul.u32 %s197, 2
        %s199 = smul.u32 4, %s17
        %s200 = ssub.s32 6, %s199
        %p201 = scmp.lt.s32.totalorder %s200, 4
        %s202 = scalar_select %p201, %s200, 4
        %s203 = smul.u32 8, %s202
        %v204 = vld [vmem:[%s192] sm:$0xff]
        %v205 = vld [vmem:[%s192 + $0x8] sm:$0xff]
        %v206 = vld [vmem:[%s192 + $0x10] sm:$0xff]
        %v207 = vld [vmem:[%s192 + $0x18] sm:$0xff]
        %v208 = vld [vmem:[%s192 + $0x20] sm:$0xff]
        %v209 = vld [vmem:[%s192 + $0x28] sm:$0xff]
        %v210 = vld [vmem:[%s192 + $0x30] sm:$0xff]
        %v211 = vld [vmem:[%s192 + $0x38] sm:$0xff]
        %v212 = vpack.c.bf16 %v206, %v204
        %v213 = vpack.c.bf16 %v207, %v205
        %v214 = vpack.c.bf16 %v210, %v208
        %v215 = vpack.c.bf16 %v211, %v209
        %v216 = vld [vmem:[%s1] sm:$0xf]
        %v217 = vld [vmem:[%s1 + $0x4] sm:$0xf]
        %v218 = vld [vmem:[%s1 + $0x8] sm:$0xf]
        %v219 = vld [vmem:[%s1 + $0xc] sm:$0xf]
        %v220 = vld [vmem:[%s1 + $0x10] sm:$0xf]
        %v221 = vld [vmem:[%s1 + $0x14] sm:$0xf]
        %v222 = vld [vmem:[%s1 + $0x18] sm:$0xf]
        %v223 = vld [vmem:[%s1 + $0x1c] sm:$0xf]
        %v224 = vld [vmem:[%s1 + $0x20] sm:$0xf]
        %v225 = vld [vmem:[%s1 + $0x24] sm:$0xf]
        %v226 = vld [vmem:[%s1 + $0x28] sm:$0xf]
        %v227 = vld [vmem:[%s1 + $0x2c] sm:$0xf]
        %v228 = vld [vmem:[%s1 + $0x30] sm:$0xf]
        %v229 = vld [vmem:[%s1 + $0x34] sm:$0xf]
        %v230 = vld [vmem:[%s1 + $0x38] sm:$0xf]
        %v231 = vld [vmem:[%s1 + $0x3c] sm:$0xf]
        %v232 = vld [vmem:[%s1 + $0x40] sm:$0xf]
        %v233 = vld [vmem:[%s1 + $0x44] sm:$0xf]
        %v234 = vld [vmem:[%s1 + $0x48] sm:$0xf]
        %v235 = vld [vmem:[%s1 + $0x4c] sm:$0xf]
        %v236 = vld [vmem:[%s1 + $0x50] sm:$0xf]
        %v237 = vld [vmem:[%s1 + $0x54] sm:$0xf]
        %v238 = vld [vmem:[%s1 + $0x58] sm:$0xf]
        %v239 = vld [vmem:[%s1 + $0x5c] sm:$0xf]
        %v240 = vld [vmem:[%s1 + $0x60] sm:$0xf]
        %v241 = vld [vmem:[%s1 + $0x64] sm:$0xf]
        %v242 = vld [vmem:[%s1 + $0x68] sm:$0xf]
        %v243 = vld [vmem:[%s1 + $0x6c] sm:$0xf]
        %v244 = vld [vmem:[%s1 + $0x70] sm:$0xf]
        %v245 = vld [vmem:[%s1 + $0x74] sm:$0xf]
        %v246 = vld [vmem:[%s1 + $0x78] sm:$0xf]
        %v247 = vld [vmem:[%s1 + $0x7c] sm:$0xf]
        %v248 = vld [vmem:[%s2] sm:$0x1]
        %v250 = vperm.slane %v248, 0
        %v284 = vunpack.c.l.b16 %v216
        %v285 = vunpack.c.l.b16 %v217
        %v286 = vunpack.c.l.b16 %v218
        %v287 = vunpack.c.l.b16 %v219
        %v288 = vunpack.c.l.b16 %v220
        %v289 = vunpack.c.l.b16 %v221
        %v290 = vunpack.c.l.b16 %v222
        %v291 = vunpack.c.l.b16 %v223
        %v292 = vunpack.c.l.b16 %v224
        %v293 = vunpack.c.l.b16 %v225
        %v294 = vunpack.c.l.b16 %v226
        %v295 = vunpack.c.l.b16 %v227
        %v296 = vunpack.c.l.b16 %v228
        %v297 = vunpack.c.l.b16 %v229
        %v298 = vunpack.c.l.b16 %v230
        %v299 = vunpack.c.l.b16 %v231
        %v300 = vunpack.c.l.b16 %v232
        %v301 = vunpack.c.l.b16 %v233
        %v302 = vunpack.c.l.b16 %v234
        %v303 = vunpack.c.l.b16 %v235
        %v304 = vunpack.c.l.b16 %v236
        %v305 = vunpack.c.l.b16 %v237
        %v306 = vunpack.c.l.b16 %v238
        %v307 = vunpack.c.l.b16 %v239
        %v308 = vunpack.c.l.b16 %v240
        %v309 = vunpack.c.l.b16 %v241
        %v310 = vunpack.c.l.b16 %v242
        %v311 = vunpack.c.l.b16 %v243
        %v312 = vunpack.c.l.b16 %v244
        %v313 = vunpack.c.l.b16 %v245
        %v314 = vunpack.c.l.b16 %v246
        %v315 = vunpack.c.l.b16 %v247
        %v316 = vpack.c.b16 %v285, %v284
        %v317 = vpack.c.b16 %v287, %v286
        %v318 = vpack.c.b16 %v289, %v288
        %v319 = vpack.c.b16 %v291, %v290
        %v320 = vpack.c.b16 %v293, %v292
        %v321 = vpack.c.b16 %v295, %v294
        %v322 = vpack.c.b16 %v297, %v296
        %v323 = vpack.c.b16 %v299, %v298
        %v324 = vpack.c.b16 %v301, %v300
        %v325 = vpack.c.b16 %v303, %v302
        %v326 = vpack.c.b16 %v305, %v304
        %v327 = vpack.c.b16 %v307, %v306
        %v328 = vpack.c.b16 %v309, %v308
        %v329 = vpack.c.b16 %v311, %v310
        %v330 = vpack.c.b16 %v313, %v312
        %v331 = vpack.c.b16 %v315, %v314
        %348 = vmatpush.bf16.msra.mxu0 %v323
        %349 = vmatpush.bf16.msra.mxu0 %v322
        %350 = vmatpush.bf16.msra.mxu0 %v321
        %351 = vmatpush.bf16.msra.mxu0 %v320
        %352 = vmatpush.bf16.msra.mxu0 %v319
        %353 = vmatpush.bf16.msra.mxu0 %v318
        %354 = vmatpush.bf16.msra.mxu0 %v317
        %355 = vmatpush.bf16.msra.mxu0 %v316
        %356 = vmatmul.bf16.gmra.mxu0 %v212
        %v357 = vpop.f32.mrf.mxu0
        %v358 = vadd.f32 %v250, %v357
        %v359 = vpop.f32.mrf.mxu0
        %v360 = vadd.f32 %v250, %v359
        %361 = vmatmul.bf16.gmra.mxu0 %v214
        %v362 = vpop.f32.mrf.mxu0
        %v363 = vadd.f32 %v250, %v362
        %v364 = vpop.f32.mrf.mxu0
        %v365 = vadd.f32 %v250, %v364
        %366 = vdwg.mxu0
        %367 = vmatpush.bf16.msra.mxu0 %v331
        %368 = vmatpush.bf16.msra.mxu0 %v330
        %369 = vmatpush.bf16.msra.mxu0 %v329
        %370 = vmatpush.bf16.msra.mxu0 %v328
        %371 = vmatpush.bf16.msra.mxu0 %v327
        %372 = vmatpush.bf16.msra.mxu0 %v326
        %373 = vmatpush.bf16.msra.mxu0 %v325
        %374 = vmatpush.bf16.msra.mxu0 %v324
        %375 = vmatmul.bf16.gmra.mxu0 %v213
        %v376 = vpop.f32.mrf.mxu0
        %v377 = vadd.f32 %v358, %v376
        %v378 = vpop.f32.mrf.mxu0
        %v379 = vadd.f32 %v360, %v378
        %380 = vmatmul.bf16.gmra.mxu0 %v215
        %v381 = vpop.f32.mrf.mxu0
        %v382 = vadd.f32 %v363, %v381
        %v383 = vpop.f32.mrf.mxu0
        %v384 = vadd.f32 %v365, %v383
        %385 = vdwg.mxu0
        %v386 = vmul.f32 %v377, %v377
        %v387 = vmul.f32 %v379, %v379
        %v388 = vmul.f32 %v382, %v382
        %v389 = vmul.f32 %v384, %v384
        %390 = vadd.xlane.f32.xlu0 %v386
        %v391 = vpop.xlane.xlu0 %390
        %392 = vadd.xlane.f32.xlu0 %v387
        %v393 = vpop.xlane.xlu0 %392
        %394 = vadd.xlane.f32.xlu0 %v388
        %v395 = vpop.xlane.xlu0 %394
        %396 = vadd.xlane.f32.xlu0 %v389
        %v397 = vpop.xlane.xlu0 %396
        %v398 = vmax.f32 %v391, 1e-12
        %v399 = vmax.f32 %v393, 1e-12
        %v400 = vmax.f32 %v395, 1e-12
        %v401 = vmax.f32 %v397, 1e-12
        %v402 = vrsqrt.pop %v398
        %v403 = vmul.f32 %v402, %v398
        %v404 = vmul.f32 %v403, %v402
        %v405 = vmul.f32 0.5, %v404
        %v406 = vsub.f32 1.5, %v405
        %v407 = vmul.f32 %v402, %v406
        %vm408 = vweird.f32 %v398
        %vm409 = vweird.f32 %v402
        %vm410 = vmor %vm408, %vm409
        %v411 = vsel %vm410, %v402, %v407
        %v412 = vrsqrt.pop %v399
        %v413 = vmul.f32 %v412, %v399
        %v414 = vmul.f32 %v413, %v412
        %v415 = vmul.f32 0.5, %v414
        %v416 = vsub.f32 1.5, %v415
        %v417 = vmul.f32 %v412, %v416
        %vm418 = vweird.f32 %v399
        %vm419 = vweird.f32 %v412
        %vm420 = vmor %vm418, %vm419
        %v421 = vsel %vm420, %v412, %v417
        %v422 = vrsqrt.pop %v400
        %v423 = vmul.f32 %v422, %v400
        %v424 = vmul.f32 %v423, %v422
        %v425 = vmul.f32 0.5, %v424
        %v426 = vsub.f32 1.5, %v425
        %v427 = vmul.f32 %v422, %v426
        %vm428 = vweird.f32 %v400
        %vm429 = vweird.f32 %v422
        %vm430 = vmor %vm428, %vm429
        %v431 = vsel %vm430, %v422, %v427
        %v432 = vrsqrt.pop %v401
        %v433 = vmul.f32 %v432, %v401
        %v434 = vmul.f32 %v433, %v432
        %v435 = vmul.f32 0.5, %v434
        %v436 = vsub.f32 1.5, %v435
        %v437 = vmul.f32 %v432, %v436
        %vm438 = vweird.f32 %v401
        %vm439 = vweird.f32 %v432
        %vm440 = vmor %vm438, %vm439
        %v441 = vsel %vm440, %v432, %v437
        %v442 = vmul.f32 %v377, %v411
        %v443 = vmul.f32 %v379, %v421
        %v444 = vmul.f32 %v382, %v431
        %v445 = vmul.f32 %v384, %v441
        %446 = vst [vmem:[%s181] sm:$0xff] %v442
        %447 = vst [vmem:[%s181 + $0x8] sm:$0xff] %v443
        %448 = vst [vmem:[%s181 + $0x10] sm:$0xff] %v444
        %449 = vst [vmem:[%s181 + $0x18] sm:$0xff] %v445
        %s450 = sand.u32 %s93, 1
        %s451 = scalar_lea.sflag [#allocation3], %s450
        %s452 = sand.u32 %s93, 1
        %s453 = smul.addr %s452, 32
        %s454 = scalar_lea.vmem [#allocation2], %s453
        // Predicated region
        $region33: #{embed.1} parent=31 // pred_check
          %p455 = pneg %p103
        $region34: #{embed.1} parent=31 // pred_check_branch
          %457 = sbr.rel (%p455) target = $region36
        $region35: #{embed.1} parent=31 // pred_region
          %s458 = smul.u32 4, %s17
          %s459 = ssub.s32 6, %s458
          %p460 = scmp.lt.s32.totalorder %s459, 4
          %s461 = scalar_select %p460, %s459, 4
          %s462 = smul.u32 8, %s461
          %s463 = ssub.s32 32, %s462
          %s464 = sshll.u32 %s463, 4
          %465 = vsyncadd %s451, %s464
          %p466 = scmp.ne.s32.totalorder 0, %s462
          %s467 = smul.addr %s458, 8
          %s468 = scalar_lea.hbm %s3, %s467
          %s469 = smul.u32 8, %s461
          %s470 = sshll.u32 %s454, 4
          %s471 = int_to_ptr.vmem [resolvable:$true] %s470
          %s472 = sshll.u32 %s468, 4
          %s473 = int_to_ptr.hbm [resolvable:$true] %s472
          %s474 = sshll.u32 %s469, 4
          %478 = dma.vmem_to_hbm [thread:$0]  (%p466), %s471, %s474, %s473, %s451, 128, 128, 8
        $region36: #{embed.1} parent=31 // pred_fallthru
          _
      $region32: #{embed.1} parent=5 // pred_fallthru
        _
      %p479 = scmp.le.s32.totalorder 2, %s12
      // Predicated region
      $region37: #{embed.1} parent=5 // pred_check
        %p480 = pneg %p479
      $region38: #{embed.1} parent=5 // pred_check_branch
        %482 = sbr.rel (%p480) target = $region40
      $region39: #{embed.1} parent=5 // pred_region
        %s483 = ssub.s32 %s12, 2
        // Predicated region
        $region41: #{embed.1} parent=39 // pred_check
          %p484 = pneg %p109
        $region42: #{embed.1} parent=39 // pred_check_branch
          %486 = sbr.rel (%p484) target = $region44
        $region43: #{embed.1} parent=39 // pred_region
          %s487 = sand.u32 %s94, 1
          %s488 = scalar_lea.sflag [#allocation3], %s487
          %s489 = sand.u32 %s94, 1
          %s490 = smul.addr %s489, 32
          %s491 = scalar_lea.vmem [#allocation2], %s490
          %493 = dma.done %s488, 512
        $region44: #{embed.1} parent=39 // pred_fallthru
          _
      $region40: #{embed.1} parent=5 // pred_fallthru
        _
    $region6: #{embed.1} parent=1 // loop_footer
      %s16 = sadd.s32 1, %s12
    $region7: #{embed.1} parent=1 // loop_footer_branch
      %11 = sbr.rel target = $region3
    $region8: #{embed.1} parent=1 // loop_exit
      _
    %494 = vsyncpa [#allocation3], 1
    %s495 = scalar_lea.sflag [#allocation3], 1
    %496 = vsyncpa %s495, 1

</llo_original>
